<compile_context>
chip_gen: v7x
topology: tpu7x:2x2x1
jax: 0.10.0
libtpu: 0.0.40
codegen_flags: <defaults>
</compile_context>

<pallas_src>
import jax
import jax.numpy as jnp
from jax.experimental import pallas as pl
from jax.experimental.pallas import tpu as pltpu


# ------------------------------ Pallas kernel -------------------------------

def patch_embed_kernel(patches_ref, wp_ref, bp_ref, cls_ref, pos0_ref,
                       posr_ref, o_ref):
    """Fused patch projection + cls token + positional embedding.

    patches_ref: (B*Np, Kp)   zero-padded, flattened patches
    wp_ref:      (Kp, D)      Conv2d weight reshaped to a matmul weight (padded)
    bp_ref:      (1, D)       Conv2d bias
    cls_ref:     (1, D)       cls token
    pos0_ref:    (1, D)       positions[0]   (cls position)
    posr_ref:    (Np, D)      positions[1:]  (patch positions)
    o_ref:       (B, Np+1, D) output tokens
    """
    B, N, D = o_ref.shape
    Np = N - 1

    # Single MXU matmul over all B*Np rows (better sublane fill than a
    # per-batch grid, no per-step pipeline overhead).
    proj = jnp.dot(patches_ref[...], wp_ref[...],
                   preferred_element_type=jnp.float32) + bp_ref[...]
    proj = proj.reshape(B, Np, D) + posr_ref[...][None, :, :]

    # Two direct stores instead of a sublane-axis concatenate.
    cls_row = (cls_ref[...] + pos0_ref[...]).reshape(1, 1, D)
    o_ref[:, 0:1, :] = jnp.broadcast_to(cls_row, (B, 1, D))
    o_ref[:, pl.ds(1, Np), :] = proj


# ------------------------------ host wrappers --------------------------------

def extract_patches(img, patch_size):
    # (B, C, H, W) -> (B, Hp*Wp, C*P*P), matching the PyTorch Conv2d weight
    # flattening order (c, kh, kw) and the 'b e h w -> b (h w) e' rearrange.
    B, C, H, W = img.shape
    P = patch_size
    Hp, Wp = H // P, W // P
    x = img.reshape(B, C, Hp, P, Wp, P)
    x = jnp.transpose(x, (0, 2, 4, 1, 3, 5))       # (B, Hp, Wp, C, P, P)
    return x.reshape(B, Hp * Wp, C * P * P)


def patch_embedding(img, wp, bp, cls_tok, pos, *, patch_size):
    """Pallas forward of PatchEmbedding.forward.

    img: (B, C, H, W); wp: (C*P*P, D) (= conv_weight.reshape(D, -1).T);
    bp: (1, D); cls_tok: (1, D); pos: (Np+1, D).
    """
    B, C, H, W = img.shape
    P = patch_size
    Np = (H // P) * (W // P)
    N = Np + 1
    D = wp.shape[1]
    K = C * P * P

    # Lane-dense contraction: zero-pad K up to a multiple of 128.
    Kp = max(128, ((K + 127) // 128) * 128)
    patches = extract_patches(img, P).reshape(B * Np, K)
    patches = jnp.pad(patches, ((0, 0), (0, Kp - K)))
    wp_p = jnp.pad(wp, ((0, Kp - K), (0, 0)))

    return pl.pallas_call(
        patch_embed_kernel,
        out_shape=jax.ShapeDtypeStruct((B, N, D), jnp.float32),
        grid=(1,),
        in_specs=[
            pl.BlockSpec((B * Np, Kp), lambda i: (0, 0)),   # patches (flat)
            pl.BlockSpec((Kp, D), lambda i: (0, 0)),        # projection weight
            pl.BlockSpec((1, D), lambda i: (0, 0)),         # projection bias
            pl.BlockSpec((1, D), lambda i: (0, 0)),         # cls token
            pl.BlockSpec((1, D), lambda i: (0, 0)),         # positions[0:1]
            pl.BlockSpec((Np, D), lambda i: (0, 0)),        # positions[1:]
        ],
        out_specs=pl.BlockSpec((B, N, D), lambda i: (0, 0, 0)),
        compiler_params=pltpu.CompilerParams(
            dimension_semantics=("arbitrary",)),
    )(patches, wp_p, bp, cls_tok, pos[0:1], pos[1:])


# ----------------------------------- main ------------------------------------

if __name__ == "__main__":
    # Small shapes consistent with the module (spec defaults scaled down).
    B = 2
    in_channels = 3
    img_size = 16
    patch_size = 4
    emb_size = 32
    num_patches = (img_size // patch_size) ** 2     # 16 patches -> 17 tokens

    key = jax.random.PRNGKey(0)
    k_img, k_w, k_b, k_cls, k_pos = jax.random.split(key, 5)

    img = jax.random.normal(
        k_img, (B, in_channels, img_size, img_size), dtype=jnp.float32)

    K = in_channels * patch_size * patch_size
    # Conv2d weight (E, C, P, P); flattened to (C*P*P, E) for the kernel matmul.
    w_conv = 0.05 * jax.random.normal(
        k_w, (emb_size, in_channels, patch_size, patch_size), dtype=jnp.float32)
    wp = w_conv.reshape(emb_size, K).T
    bp = 0.05 * jax.random.normal(k_b, (1, emb_size), dtype=jnp.float32)
    cls_tok = jax.random.normal(k_cls, (1, emb_size), dtype=jnp.float32)
    pos = jax.random.normal(k_pos, (num_patches + 1, emb_size), dtype=jnp.float32)

    out = patch_embedding(img, wp, bp, cls_tok, pos, patch_size=patch_size)
    out = jax.block_until_ready(out)

    # Pure-JAX reference (conv -> rearrange -> cat cls -> + positions).
    ref_conv = jax.lax.conv_general_dilated(
        img, w_conv, window_strides=(patch_size, patch_size), padding="VALID",
        dimension_numbers=("NCHW", "OIHW", "NCHW"))
    ref_conv = ref_conv + bp.reshape(1, emb_size, 1, 1)
    Hp = img_size // patch_size
    ref_tok = jnp.transpose(ref_conv, (0, 2, 3, 1)).reshape(B, Hp * Hp, emb_size)
    cls_b = jnp.broadcast_to(cls_tok.reshape(1, 1, emb_size), (B, 1, emb_size))
    ref = jnp.concatenate([cls_b, ref_tok], axis=1) + pos[None]

    assert out.shape == (B, num_patches + 1, emb_size), out.shape
    assert bool(jnp.all(jnp.isfinite(out)))
    max_err = float(jnp.max(jnp.abs(out - ref)))
    assert max_err < 5e-3, f"mismatch vs reference: {max_err}"
    print("KERNEL_OK")
</pallas_src>

<mosaic_0001>
module attributes {stable_mosaic.version = 11 : i64} {
  func.func @patch_embed_kernel(%arg0: i32, %arg1: memref<32x128xf32, #tpu.memory_space<vmem>>, %arg2: memref<128x32xf32, #tpu.memory_space<vmem>>, %arg3: memref<1x32xf32, #tpu.memory_space<vmem>>, %arg4: memref<1x32xf32, #tpu.memory_space<vmem>>, %arg5: memref<1x32xf32, #tpu.memory_space<vmem>>, %arg6: memref<16x32xf32, #tpu.memory_space<vmem>>, %arg7: memref<2x17x32xf32, #tpu.memory_space<vmem>>) attributes {dimension_semantics = [#tpu.dimension_semantics<arbitrary>], iteration_bounds = array<i64: 1>, scalar_prefetch = 0 : i64, scratch_operands = 0 : i64, tpu.core_type = #tpu.core_type<tc>, window_params = [{pipeline_mode = #tpu.pipeline_mode<synchronous>, transform_indices = @transform_0, window_bounds = array<i64: 32, 128>}, {pipeline_mode = #tpu.pipeline_mode<synchronous>, transform_indices = @transform_1, window_bounds = array<i64: 128, 32>}, {pipeline_mode = #tpu.pipeline_mode<synchronous>, transform_indices = @transform_2, window_bounds = array<i64: 1, 32>}, {pipeline_mode = #tpu.pipeline_mode<synchronous>, transform_indices = @transform_3, window_bounds = array<i64: 1, 32>}, {pipeline_mode = #tpu.pipeline_mode<synchronous>, transform_indices = @transform_4, window_bounds = array<i64: 1, 32>}, {pipeline_mode = #tpu.pipeline_mode<synchronous>, transform_indices = @transform_5, window_bounds = array<i64: 16, 32>}, {pipeline_mode = #tpu.pipeline_mode<synchronous>, transform_indices = @transform_6, window_bounds = array<i64: 2, 17, 32>}]} {
    %c0 = arith.constant 0 : index
    %c0_0 = arith.constant 0 : index
    %0 = vector.load %arg1[%c0, %c0_0] : memref<32x128xf32, #tpu.memory_space<vmem>>, vector<32x128xf32>
    %c0_1 = arith.constant 0 : index
    %c0_2 = arith.constant 0 : index
    %1 = vector.load %arg2[%c0_1, %c0_2] : memref<128x32xf32, #tpu.memory_space<vmem>>, vector<128x32xf32>
    %cst = arith.constant dense<0.000000e+00> : vector<32x32xf32>
    %2 = tpu.matmul %0, %1, %cst {dimension_numbers = #tpu.dot_dimension_numbers<[1], [0], [0], [1], [0, 0, 1, 1], [], []>} : vector<32x128xf32>, vector<128x32xf32>, vector<32x32xf32> -> vector<32x32xf32>
    %c0_3 = arith.constant 0 : index
    %c0_4 = arith.constant 0 : index
    %3 = vector.load %arg3[%c0_3, %c0_4] : memref<1x32xf32, #tpu.memory_space<vmem>>, vector<1x32xf32>
    %4 = vector.broadcast %3 : vector<1x32xf32> to vector<32x32xf32>
    %5 = arith.addf %2, %4 : vector<32x32xf32>
    %6 = vector.shape_cast %5 : vector<32x32xf32> to vector<2x16x32xf32>
    %c0_5 = arith.constant 0 : index
    %c0_6 = arith.constant 0 : index
    %7 = vector.load %arg6[%c0_5, %c0_6] : memref<16x32xf32, #tpu.memory_space<vmem>>, vector<16x32xf32>
    %8 = vector.shape_cast %7 : vector<16x32xf32> to vector<1x16x32xf32>
    %9 = vector.broadcast %8 : vector<1x16x32xf32> to vector<2x16x32xf32>
    %10 = arith.addf %6, %9 : vector<2x16x32xf32>
    %c0_7 = arith.constant 0 : index
    %c0_8 = arith.constant 0 : index
    %11 = vector.load %arg4[%c0_7, %c0_8] : memref<1x32xf32, #tpu.memory_space<vmem>>, vector<1x32xf32>
    %c0_9 = arith.constant 0 : index
    %c0_10 = arith.constant 0 : index
    %12 = vector.load %arg5[%c0_9, %c0_10] : memref<1x32xf32, #tpu.memory_space<vmem>>, vector<1x32xf32>
    %13 = arith.addf %11, %12 : vector<1x32xf32>
    %14 = vector.shape_cast %13 : vector<1x32xf32> to vector<1x1x32xf32>
    %15 = vector.shape_cast %14 : vector<1x1x32xf32> to vector<1x1x32xf32>
    %16 = vector.broadcast %15 : vector<1x1x32xf32> to vector<2x1x32xf32>
    %c0_11 = arith.constant 0 : index
    %c0_12 = arith.constant 0 : index
    %c0_13 = arith.constant 0 : index
    %17 = vector.load %arg7[%c0_11, %c0_12, %c0_13] : memref<2x17x32xf32, #tpu.memory_space<vmem>>, vector<2x1x32xf32>
    tpu.vector_store %arg7[%c0_11, %c0_12, %c0_13], %16 {strides = array<i32>} : memref<2x17x32xf32, #tpu.memory_space<vmem>>, vector<2x1x32xf32>,
    %c0_14 = arith.constant 0 : index
    %c1 = arith.constant 1 : index
    %c0_15 = arith.constant 0 : index
    %18 = vector.load %arg7[%c0_14, %c1, %c0_15] : memref<2x17x32xf32, #tpu.memory_space<vmem>>, vector<2x16x32xf32>
    tpu.vector_store %arg7[%c0_14, %c1, %c0_15], %10 {strides = array<i32>} : memref<2x17x32xf32, #tpu.memory_space<vmem>>, vector<2x16x32xf32>,
    return
  }
  func.func @transform_0(%arg0: i32) -> (i32, i32) {
    %c0_i32 = arith.constant 0 : i32
    %c0_i32_0 = arith.constant 0 : i32
    %c0_i32_1 = arith.constant 0 : i32
    return %c0_i32, %c0_i32_0 : i32, i32
  }
  func.func @transform_1(%arg0: i32) -> (i32, i32) {
    %c0_i32 = arith.constant 0 : i32
    %c0_i32_0 = arith.constant 0 : i32
    %c0_i32_1 = arith.constant 0 : i32
    return %c0_i32, %c0_i32_0 : i32, i32
  }
  func.func @transform_2(%arg0: i32) -> (i32, i32) {
    %c0_i32 = arith.constant 0 : i32
    %c0_i32_0 = arith.constant 0 : i32
    %c0_i32_1 = arith.constant 0 : i32
    return %c0_i32, %c0_i32_0 : i32, i32
  }
  func.func @transform_3(%arg0: i32) -> (i32, i32) {
    %c0_i32 = arith.constant 0 : i32
    %c0_i32_0 = arith.constant 0 : i32
    %c0_i32_1 = arith.constant 0 : i32
    return %c0_i32, %c0_i32_0 : i32, i32
  }
  func.func @transform_4(%arg0: i32) -> (i32, i32) {
    %c0_i32 = arith.constant 0 : i32
    %c0_i32_0 = arith.constant 0 : i32
    %c0_i32_1 = arith.constant 0 : i32
    return %c0_i32, %c0_i32_0 : i32, i32
  }
  func.func @transform_5(%arg0: i32) -> (i32, i32) {
    %c0_i32 = arith.constant 0 : i32
    %c0_i32_0 = arith.constant 0 : i32
    %c0_i32_1 = arith.constant 0 : i32
    return %c0_i32, %c0_i32_0 : i32, i32
  }
  func.func @transform_6(%arg0: i32) -> (i32, i32, i32) {
    %c0_i32 = arith.constant 0 : i32
    %c0_i32_0 = arith.constant 0 : i32
    %c0_i32_1 = arith.constant 0 : i32
    %c0_i32_2 = arith.constant 0 : i32
    return %c0_i32, %c0_i32_0, %c0_i32_1 : i32, i32, i32
  }
}

</mosaic_0001>

<llo_original>
// kernel: tpu_custom_call.1
$region0: #{tpu_custom_call.1}
  #allocation0 [shape = 'u32[]', space=smem, size = 0x4, offset = 0x4, fixed_abs, tag = 'smem constant byte address 0x4 - core index']
  #allocation1 [shape = 'u32[144,128]{1,0:T(1,128)}', space=vmem, size = 0x12000, scoped, tag = 'internal scratch']
  %s0 = inlined_call_operand.vmem [shape: f32[32,128], index: 0, kind: input, shape index: {}]
  %s1 = inlined_call_operand.vmem [shape: f32[128,32], index: 1, kind: input, shape index: {}]
  %s2 = inlined_call_operand.vmem [shape: f32[1,32], index: 2, kind: input, shape index: {}]
  %s3 = inlined_call_operand.vmem [shape: f32[1,32], index: 3, kind: input, shape index: {}]
  %s4 = inlined_call_operand.vmem [shape: f32[1,32], index: 4, kind: input, shape index: {}]
  %s5 = inlined_call_operand.vmem [shape: f32[16,32], index: 5, kind: input, shape index: {}]
  %s6 = inlined_call_operand.vmem [shape: f32[2,17,32], index: 6, kind: output, shape index: {}]
  %s7 = sld [smem:[#allocation0]]
  $region34: #{tpu_custom_call.1} parent=0
    _
  %s9 = ssub.s32 1, %s7
  %s10 = scalar_select 0, %s9, %s7
  // Predicated region
  $region2: #{tpu_custom_call.1} parent=0 // pred_check
    _
  $region3: #{tpu_custom_call.1} parent=0 // pred_check_branch
    %12 = sbr.rel (0) target = $region5
  $region4: #{tpu_custom_call.1} parent=0 // pred_region
    _
  $region5: #{tpu_custom_call.1} parent=0 // pred_fallthru
    _
  // Predicated region
  $region6: #{tpu_custom_call.1} parent=0 // pred_check
    _
  $region7: #{tpu_custom_call.1} parent=0 // pred_check_branch
    %14 = sbr.rel (0) target = $region9
  $region8: #{tpu_custom_call.1} parent=0 // pred_region
    _
  $region9: #{tpu_custom_call.1} parent=0 // pred_fallthru
    _
  // Predicated region
  $region10: #{tpu_custom_call.1} parent=0 // pred_check
    _
  $region11: #{tpu_custom_call.1} parent=0 // pred_check_branch
    %16 = sbr.rel (0) target = $region13
  $region12: #{tpu_custom_call.1} parent=0 // pred_region
    _
  $region13: #{tpu_custom_call.1} parent=0 // pred_fallthru
    _
  // Predicated region
  $region14: #{tpu_custom_call.1} parent=0 // pred_check
    _
  $region15: #{tpu_custom_call.1} parent=0 // pred_check_branch
    %18 = sbr.rel (0) target = $region17
  $region16: #{tpu_custom_call.1} parent=0 // pred_region
    _
  $region17: #{tpu_custom_call.1} parent=0 // pred_fallthru
    _
  // Predicated region
  $region18: #{tpu_custom_call.1} parent=0 // pred_check
    _
  $region19: #{tpu_custom_call.1} parent=0 // pred_check_branch
    %20 = sbr.rel (0) target = $region21
  $region20: #{tpu_custom_call.1} parent=0 // pred_region
    _
  $region21: #{tpu_custom_call.1} parent=0 // pred_fallthru
    _
  // Predicated region
  $region22: #{tpu_custom_call.1} parent=0 // pred_check
    _
  $region23: #{tpu_custom_call.1} parent=0 // pred_check_branch
    %22 = sbr.rel (0) target = $region25
  $region24: #{tpu_custom_call.1} parent=0 // pred_region
    _
  $region25: #{tpu_custom_call.1} parent=0 // pred_fallthru
    _
  %v23 = vld [vmem:[%s0] sm:$0xff]
  %v24 = vld [vmem:[%s0 + $0x8] sm:$0xff]
  %v25 = vld [vmem:[%s0 + $0x10] sm:$0xff]
  %v26 = vld [vmem:[%s0 + $0x18] sm:$0xff]
  %v27 = vld [vmem:[%s1] sm:$0xff]
  %v28 = vld [vmem:[%s1 + $0x8] sm:$0xff]
  %v29 = vld [vmem:[%s1 + $0x10] sm:$0xff]
  %v30 = vld [vmem:[%s1 + $0x18] sm:$0xff]
  %v31 = vld [vmem:[%s1 + $0x20] sm:$0xff]
  %v32 = vld [vmem:[%s1 + $0x28] sm:$0xff]
  %v33 = vld [vmem:[%s1 + $0x30] sm:$0xff]
  %v34 = vld [vmem:[%s1 + $0x38] sm:$0xff]
  %v35 = vld [vmem:[%s1 + $0x40] sm:$0xff]
  %v36 = vld [vmem:[%s1 + $0x48] sm:$0xff]
  %v37 = vld [vmem:[%s1 + $0x50] sm:$0xff]
  %v38 = vld [vmem:[%s1 + $0x58] sm:$0xff]
  %v39 = vld [vmem:[%s1 + $0x60] sm:$0xff]
  %v40 = vld [vmem:[%s1 + $0x68] sm:$0xff]
  %v41 = vld [vmem:[%s1 + $0x70] sm:$0xff]
  %v42 = vld [vmem:[%s1 + $0x78] sm:$0xff]
  %v43 = vld [vmem:[%s2] sm:$0x1]
  %v45 = vlaneseq
  %v46 = vshrl.u32 %v45, 7
  %v47 = vsub.s32 0, %v46
  %v48 = vrot.slane %v43, %v47
  %50 = vmatprep.subr.mxu0 0.0
  %51 = vmatpush1.msra.mxu0 %v27
  %52 = vmatprep.subr.mxu0 0.0
  %53 = vmatpush1.msra.mxu0 %v28
  %54 = vmatprep.subr.mxu0 0.0
  %55 = vmatpush1.msra.mxu0 %v29
  %56 = vmatprep.subr.mxu0 0.0
  %57 = vmatpush1.msra.mxu0 %v30
  %58 = vmatprep.subr.mxu0 0.0
  %59 = vmatpush1.msra.mxu0 %v31
  %60 = vmatprep.subr.mxu0 0.0
  %61 = vmatpush1.msra.mxu0 %v32
  %62 = vmatprep.subr.mxu0 0.0
  %63 = vmatpush1.msra.mxu0 %v33
  %64 = vmatprep.subr.mxu0 0.0
  %65 = vmatpush1.msra.mxu0 %v34
  %66 = vmatprep.subr.mxu0 0.0
  %67 = vmatpush1.msra.mxu0 %v35
  %68 = vmatprep.subr.mxu0 0.0
  %69 = vmatpush1.msra.mxu0 %v36
  %70 = vmatprep.subr.mxu0 0.0
  %71 = vmatpush1.msra.mxu0 %v37
  %72 = vmatprep.subr.mxu0 0.0
  %73 = vmatpush1.msra.mxu0 %v38
  %74 = vmatprep.subr.mxu0 0.0
  %75 = vmatpush1.msra.mxu0 %v39
  %76 = vmatprep.subr.mxu0 0.0
  %77 = vmatpush1.msra.mxu0 %v40
  %78 = vmatprep.subr.mxu0 0.0
  %79 = vmatpush1.msra.mxu0 %v41
  %80 = vmatprep.subr.mxu0 0.0
  %81 = vmatpush1.msra.mxu0 %v42
  %82 = vmatprep.subr.mxu0 0.0
  %83 = vmatpush1.msra.mxu0 0.0
  %84 = vmatprep.subr.mxu0 0.0
  %85 = vmatpush1.msra.mxu0 0.0
  %86 = vmatprep.subr.mxu0 0.0
  %87 = vmatpush1.msra.mxu0 0.0
  %88 = vmatprep.subr.mxu0 0.0
  %89 = vmatpush1.msra.mxu0 0.0
  %90 = vmatprep.subr.mxu0 0.0
  %91 = vmatpush1.msra.mxu0 0.0
  %92 = vmatprep.subr.mxu0 0.0
  %93 = vmatpush1.msra.mxu0 0.0
  %94 = vmatprep.subr.mxu0 0.0
  %95 = vmatpush1.msra.mxu0 0.0
  %96 = vmatprep.subr.mxu0 0.0
  %97 = vmatpush1.msra.mxu0 0.0
  %98 = vmatprep.subr.mxu0 0.0
  %99 = vmatpush1.msra.mxu0 0.0
  %100 = vmatprep.subr.mxu0 0.0
  %101 = vmatpush1.msra.mxu0 0.0
  %102 = vmatprep.subr.mxu0 0.0
  %103 = vmatpush1.msra.mxu0 0.0
  %104 = vmatprep.subr.mxu0 0.0
  %105 = vmatpush1.msra.mxu0 0.0
  %106 = vmatprep.subr.mxu0 0.0
  %107 = vmatpush1.msra.mxu0 0.0
  %108 = vmatprep.subr.mxu0 0.0
  %109 = vmatpush1.msra.mxu0 0.0
  %110 = vmatprep.subr.mxu0 0.0
  %111 = vmatpush1.msra.mxu0 0.0
  %112 = vmatprep.subr.mxu0 0.0
  %113 = vmatpush1.msra.mxu0 0.0
  %114 = vmatprep.mubr.f32.mxu0 0.0
  %115 = vmatmul.mubr.f32.gmra.mrb[0].mxu0 %v23
  %v116 = vpop.f32.mrb[0].mxu0
  %v117 = vadd.f32 %v48, %v116
  %v118 = vpop.f32.mrb[0].mxu0
  %119 = vmatprep.mubr.f32.mxu0 0.0
  %120 = vmatmul.mubr.f32.gmra.mrb[0].mxu0 %v24
  %v121 = vpop.f32.mrb[0].mxu0
  %v122 = vadd.f32 %v48, %v121
  %v123 = vpop.f32.mrb[0].mxu0
  %124 = vmatprep.mubr.f32.mxu0 0.0
  %125 = vmatmul.mubr.f32.gmra.mrb[0].mxu0 %v25
  %v126 = vpop.f32.mrb[0].mxu0
  %v127 = vadd.f32 %v48, %v126
  %v128 = vpop.f32.mrb[0].mxu0
  %129 = vmatprep.mubr.f32.mxu0 0.0
  %130 = vmatmul.mubr.f32.gmra.mrb[0].mxu0 %v26
  %v131 = vpop.f32.mrb[0].mxu0
  %v132 = vadd.f32 %v48, %v131
  %v133 = vpop.f32.mrb[0].mxu0
  %134 = vdwg.mxu0
  %v135 = vld [vmem:[%s5] sm:$0xff]
  %v136 = vld [vmem:[%s5 + $0x8] sm:$0xff]
  %v137 = vadd.f32 %v117, %v135
  %v138 = vadd.f32 %v122, %v136
  %v139 = vadd.f32 %v127, %v135
  %v140 = vadd.f32 %v132, %v136
  %v141 = vld [vmem:[%s3] sm:$0x1]
  %v142 = vld [vmem:[%s4] sm:$0x1]
  %v143 = vadd.f32 %v141, %v142
  %vm144 = vcmask 253952
  %145 = vst.msk [vmem:[%s6] sm:$0x1] %vm144, %v143
  %146 = vst.msk [vmem:[%s6 + $0x18] sm:$0x1] %vm144, %v143
  %vm147 = vcmask 261120
  %148 = vst.msk [vmem:[%s6 + $0x1] sm:$0xff] %vm147, %v137
  %149 = vst.msk [vmem:[%s6 + $0x9] sm:$0xff] %vm147, %v138
  %150 = vst.msk [vmem:[%s6 + $0x19] sm:$0xff] %vm147, %v139
  %151 = vst.msk [vmem:[%s6 + $0x21] sm:$0xff] %vm147, %v140
  // Predicated region
  $region26: #{tpu_custom_call.1} parent=0 // pred_check
    _
  $region27: #{tpu_custom_call.1} parent=0 // pred_check_branch
    %153 = sbr.rel (0) target = $region29
  $region28: #{tpu_custom_call.1} parent=0 // pred_region
    _
  $region29: #{tpu_custom_call.1} parent=0 // pred_fallthru
    _
  // Predicated region
  $region30: #{tpu_custom_call.1} parent=0 // pred_check
    _
  $region31: #{tpu_custom_call.1} parent=0 // pred_check_branch
    %155 = sbr.rel (0) target = $region33
  $region32: #{tpu_custom_call.1} parent=0 // pred_region
    _
  $region33: #{tpu_custom_call.1} parent=0 // pred_fallthru
    _

</llo_original>
